<compile_context>
chip_gen: v5e
topology: v5e:2x2
jax: 0.10.0
libtpu: 0.0.40
codegen_flags: <defaults>
</compile_context>

<pallas_src>
import functools

import jax
import jax.numpy as jnp
from jax import lax
from jax.experimental import pallas as pl
from jax.experimental.pallas import tpu as pltpu


def _fold_lanes_to_128(x, width):
    """Sum a (C, width) f32 array down to (C, 128) using only 128-aligned static
    column slices (pure VPU adds, no cross-lane XLU work in the hot loop).
    `width` must be a positive multiple of 128 (static Python int)."""
    tail = None
    while width > 128:
        n128 = width // 128
        if n128 % 2 == 1:                      # peel the odd trailing 128-chunk
            last = x[:, width - 128:width]
            tail = last if tail is None else tail + last
            width -= 128
        half = width // 2                       # still a multiple of 128
        x = x[:, :half] + x[:, half:width]
        width = half
    return x if tail is None else x + tail


def _context_embedding_kernel(x_ref, w_ref, o_ref, acc_ref, *,
                              hw, hw_tile, tiles_per_split, need_mask):
    """Per-(image, split) streaming spatial sum + folded 1x1-conv epilogue.

    x_ref:   (1, Cin, hw_tile)  input tile (lane-dense HW)
    w_ref:   (Cout, Cin)        conv weight with BN scale and 1/(H*W) folded in
    o_ref:   (1, 1, Cout, 1)    per-split pre-activation conv partial (f32)
    acc_ref: (Cin, 128)         f32 scratch holding lane-partial spatial sums
    """
    s = pl.program_id(1)
    t = pl.program_id(2)

    @pl.when(t == 0)
    def _init():
        acc_ref[...] = jnp.zeros_like(acc_ref)

    x_t = x_ref[0].astype(jnp.float32)                       # (Cin, hw_tile)

    if need_mask:
        # Zero spatial positions past H*W (ragged tail tile and/or tiles padded
        # so the tile count divides the split count).
        g = s * tiles_per_split + t                           # global HW-tile id
        pos = g * hw_tile + lax.broadcasted_iota(jnp.int32, x_t.shape, 1)
        x_t = jnp.where(pos < hw, x_t, 0.0)

    if hw_tile % 128 == 0:
        # Deferred cross-lane reduce: hot loop is only vreg-aligned VPU adds.
        acc_ref[...] += _fold_lanes_to_128(x_t, hw_tile)
    else:
        # Single full-HW tile whose width is not a multiple of 128 (rare,
        # small): place the lane-reduced column into lane 0 of the accumulator.
        col = jnp.sum(x_t, axis=-1, keepdims=True)            # (Cin, 1)
        lane = lax.broadcasted_iota(jnp.int32, (x_t.shape[0], 128), 1)
        acc_ref[...] += jnp.where(lane == 0, col, 0.0)

    @pl.when(t == pl.num_programs(2) - 1)
    def _finalize():
        # MXU contraction over Cin: (Cout,Cin) @ (Cin,128) -> (Cout,128), then
        # one small lane reduce.  Runs once per image/split.
        y = lax.dot_general(w_ref[...], acc_ref[...],
                            dimension_numbers=(((1,), (0,)), ((), ())),
                            preferred_element_type=jnp.float32)     # (Cout, 128)
        o_ref[...] = jnp.sum(y, axis=-1, keepdims=True)[None, None]  # (1,1,Cout,1)


def _pick_hw_tile(hw, cin, itemsize, budget_bytes):
    """Largest lane-dense HW tile whose (Cin, hw_tile) block fits the per-buffer
    VMEM budget: the full H*W when it fits, otherwise a multiple of 128 (the
    ragged tail tile is masked in-kernel, no giant-block fallback).  We prefer
    fitting VMEM over the >=512-lane DMA-row floor for pathological Cin."""
    bytes_per_col = max(cin, 1) * itemsize
    if hw <= 128 or hw * bytes_per_col <= budget_bytes:
        return hw
    tile = (budget_bytes // bytes_per_col) // 128 * 128
    return int(max(tile, 128))


def _vmem_limit_bytes(cin, cout, hw_tile, x_itemsize):
    """Conservative scoped-VMEM request: double-buffered x / w / out blocks +
    f32 accumulator scratch + slack, with (sublane, lane) padding.  Floors at
    16 MiB and caps at v7x's 64 MiB physical VMEM."""
    def pad2(rows, cols, itemsize):
        return ((rows + 15) // 16 * 16) * ((cols + 127) // 128 * 128) * itemsize
    total = (2 * pad2(cin, hw_tile, x_itemsize)    # x tile (double-buffered)
             + 2 * pad2(cout, cin, 4)              # folded weight
             + 2 * pad2(cout, 1, 4)                # per-split output block
             + pad2(cin, 128, 4)                   # accumulator scratch
             + (2 << 20))                          # slack
    return int(min(max(total, 16 << 20), 64 << 20))


@functools.partial(jax.jit, static_argnames=("eps", "max_tile_bytes"))
def context_embedding(x, conv_w, bn_gamma, bn_beta, bn_mean, bn_var,
                      eps=1e-5, max_tile_bytes=8 * 1024 * 1024):
    """Pallas-backed ContextEmbedding.forward.

    x:       (N, Cin, H, W)
    conv_w:  (Cout, Cin, 1, 1)  Conv2d weight (bias=False)
    bn_*:    (Cout,)            eval-mode BatchNorm2d params / running stats
    max_tile_bytes: per-buffer VMEM budget for the streamed x tile
                    (8 MiB default; ~16-24 MiB is reasonable on v7x).
    returns: (N, Cout, H, W)
    """
    n, cin, h, w = x.shape
    cout = conv_w.shape[0]
    hw = h * w

    # Fold eval-mode BN (running stats) and the 1/(H*W) averaging divisor into
    # the 1x1 conv weight (natural (Cout, Cin) layout), in f32.
    scale = bn_gamma.astype(jnp.float32) * lax.rsqrt(
        bn_var.astype(jnp.float32) + jnp.float32(eps))
    w_eff = (conv_w.reshape(cout, cin).astype(jnp.float32)
             * scale[:, None]) / jnp.float32(hw)                       # (Cout, Cin)
    b_eff = (bn_beta.astype(jnp.float32)
             - bn_mean.astype(jnp.float32) * scale).reshape(cout, 1)   # (Cout, 1)

    x3 = x.reshape(n, cin, hw)            # free reshape for contiguous NCHW

    hw_tile = _pick_hw_tile(hw, cin, x.dtype.itemsize, max_tile_bytes)
    tiles_total = pl.cdiv(hw, hw_tile)
    # Split the HW reduction in two so both v7x TensorCores stream HBM even at
    # N == 1.  Harmless on 1-TC chips (same total tile count).
    n_splits = 2 if tiles_total >= 2 else 1
    tiles_per_split = pl.cdiv(tiles_total, n_splits)
    padded_tiles = n_splits * tiles_per_split
    need_mask = padded_tiles * hw_tile != hw
    need_clamp = padded_tiles > tiles_total

    if need_clamp:
        def x_map(i, s, t):
            g = s * tiles_per_split + t
            return (i, 0, jnp.minimum(g, tiles_total - 1))   # masked tile -> 0
    else:
        def x_map(i, s, t):
            return (i, 0, s * tiles_per_split + t)

    kernel = functools.partial(
        _context_embedding_kernel, hw=hw, hw_tile=hw_tile,
        tiles_per_split=tiles_per_split, need_mask=need_mask)

    part = pl.pallas_call(
        kernel,
        out_shape=jax.ShapeDtypeStruct((n, n_splits, cout, 1), jnp.float32),
        grid_spec=pltpu.PrefetchScalarGridSpec(
            num_scalar_prefetch=0,
            grid=(n, n_splits, tiles_per_split),
            in_specs=[
                pl.BlockSpec((1, cin, hw_tile), x_map),
                pl.BlockSpec((cout, cin), lambda i, s, t: (0, 0)),
            ],
            out_specs=pl.BlockSpec((1, 1, cout, 1),
                                   lambda i, s, t: (i, s, 0, 0)),
            scratch_shapes=[pltpu.VMEM((cin, 128), jnp.float32)],
        ),
        compiler_params=pltpu.CompilerParams(
            dimension_semantics=("parallel", "parallel", "arbitrary"),
            vmem_limit_bytes=_vmem_limit_bytes(cin, cout, hw_tile,
                                               x.dtype.itemsize),
        ),
    )(x3, w_eff)

    # The 1x1 conv is linear, so per-split partials just add.  Bias + ReLU on a
    # tiny (N, Cout) tensor, then the nearest upsample of a 1x1 map == broadcast
    # (left to XLA so the kernel never writes the redundant full-size tensor).
    y = jnp.maximum(jnp.sum(part, axis=1) + b_eff[None], 0.0)          # (N, Cout, 1)
    y = y.astype(x.dtype).reshape(n, cout, 1, 1)
    return jnp.broadcast_to(y, (n, cout, h, w))


def _reference(x, conv_w, gamma, beta, mean, var, eps=1e-5):
    """Pure-JAX reference of the PyTorch forward (eval-mode BN)."""
    n, cin, h, w = x.shape
    cout = conv_w.shape[0]
    avg = jnp.mean(x.astype(jnp.float32), axis=(2, 3))                  # (N, Cin)
    y = avg @ conv_w.reshape(cout, cin).astype(jnp.float32).T           # (N, Cout)
    s = gamma.astype(jnp.float32) / jnp.sqrt(var.astype(jnp.float32) + eps)
    y = jnp.maximum(
        y * s + (beta.astype(jnp.float32) - mean.astype(jnp.float32) * s), 0.0)
    return jnp.broadcast_to(y.astype(x.dtype)[:, :, None, None],
                            (n, cout, h, w))


if __name__ == "__main__":
    key = jax.random.PRNGKey(0)
    k1, k2, k3, k4, k5, k6, k7, k8 = jax.random.split(key, 8)

    N, Cin, Cout = 2, 32, 64
    conv_w = jax.random.normal(k2, (Cout, Cin, 1, 1), jnp.float32) * 0.1
    gamma = jax.random.uniform(k3, (Cout,), jnp.float32, 0.5, 1.5)
    beta = jax.random.normal(k4, (Cout,), jnp.float32) * 0.1
    mean = jax.random.normal(k5, (Cout,), jnp.float32) * 0.1
    var = jax.random.uniform(k6, (Cout,), jnp.float32, 0.5, 1.5)

    def check(xin, **kw):
        out = jax.block_until_ready(
            context_embedding(xin, conv_w, gamma, beta, mean, var, **kw))
        ref = _reference(xin, conv_w, gamma, beta, mean, var)
        assert out.shape == ref.shape, (out.shape, ref.shape)
        err = float(jnp.max(jnp.abs(out.astype(jnp.float32)
                                    - ref.astype(jnp.float32))))
        assert jnp.allclose(out, ref, rtol=1e-4, atol=1e-4), err

    small_tile = 128 * Cin * 4   # force hw_tile == 128 to exercise tiling paths

    # 1) Single full-HW tile (default budget), no HW split.
    check(jax.random.normal(k1, (N, Cin, 16, 16), jnp.float32))
    # 2) Multi-tile + 2-way HW split across the parallel axis.
    check(jax.random.normal(k7, (N, Cin, 16, 16), jnp.float32),
          max_tile_bytes=small_tile)
    # 3) Ragged H*W (masked tail tile).
    check(jax.random.normal(k8, (N, Cin, 13, 13), jnp.float32),
          max_tile_bytes=small_tile)
    # 4) Odd tile count (clamped index map + fully-masked padded tile), N=1.
    check(jax.random.normal(k1, (1, Cin, 20, 15), jnp.float32),
          max_tile_bytes=small_tile)
    # 5) Single full-HW tile whose width is not a multiple of 128.
    check(jax.random.normal(k8, (N, Cin, 13, 13), jnp.float32))

    print("KERNEL_OK")
</pallas_src>

<mosaic_0001>
module attributes {stable_mosaic.version = 11 : i64} {
  func.func @_context_embedding_kernel(%arg0: i32, %arg1: i32, %arg2: i32, %arg3: memref<1x32x256xf32, #tpu.memory_space<vmem>>, %arg4: memref<64x32xf32, #tpu.memory_space<vmem>>, %arg5: memref<1x1x64x1xf32, #tpu.memory_space<vmem>>, %arg6: memref<32x128xf32, #tpu.memory_space<vmem>>) attributes {dimension_semantics = [#tpu.dimension_semantics<parallel>, #tpu.dimension_semantics<parallel>, #tpu.dimension_semantics<arbitrary>], iteration_bounds = array<i64: 2, 1, 1>, scalar_prefetch = 0 : i64, scratch_operands = 1 : i64, tpu.core_type = #tpu.core_type<tc>, window_params = [{transform_indices = @transform_0, window_bounds = array<i64: 1, 32, 256>}, {pipeline_mode = #tpu.pipeline_mode<synchronous>, transform_indices = @transform_1, window_bounds = array<i64: 64, 32>}, {transform_indices = @transform_2, window_bounds = array<i64: 1, 1, 64, 1>}]} {
    %c0_i32 = arith.constant 0 : i32
    %0 = arith.cmpi eq, %arg2, %c0_i32 : i32
    %1 = arith.extui %0 : i1 to i32
    %c0_i32_0 = arith.constant 0 : i32
    %2 = arith.cmpi ne, %1, %c0_i32_0 : i32
    scf.if %2 {
      %cst = arith.constant 0.000000e+00 : f32
      %14 = vector.broadcast %cst : f32 to vector<32x128xf32>
      %c0_9 = arith.constant 0 : index
      %c0_10 = arith.constant 0 : index
      %15 = vector.load %arg6[%c0_9, %c0_10] : memref<32x128xf32, #tpu.memory_space<vmem>>, vector<32x128xf32>
      tpu.vector_store %arg6[%c0_9, %c0_10], %14 {strides = array<i32>} : memref<32x128xf32, #tpu.memory_space<vmem>>, vector<32x128xf32>,
    } else {
    }
    %c0 = arith.constant 0 : index
    %c0_1 = arith.constant 0 : index
    %c0_2 = arith.constant 0 : index
    %3 = vector.load %arg3[%c0, %c0_1, %c0_2] : memref<1x32x256xf32, #tpu.memory_space<vmem>>, vector<1x32x256xf32>
    %4 = vector.shape_cast %3 : vector<1x32x256xf32> to vector<32x256xf32>
    %c0_3 = arith.constant 0 : index
    %c0_4 = arith.constant 0 : index
    %5 = vector.load %arg6[%c0_3, %c0_4] : memref<32x128xf32, #tpu.memory_space<vmem>>, vector<32x128xf32>
    %6 = vector.extract_strided_slice %4 {offsets = [0, 0], sizes = [32, 128], strides = [1, 1]} : vector<32x256xf32> to vector<32x128xf32>
    %7 = vector.extract_strided_slice %4 {offsets = [0, 128], sizes = [32, 128], strides = [1, 1]} : vector<32x256xf32> to vector<32x128xf32>
    %8 = arith.addf %6, %7 : vector<32x128xf32>
    %9 = arith.addf %5, %8 : vector<32x128xf32>
    %c0_5 = arith.constant 0 : index
    %c0_6 = arith.constant 0 : index
    %10 = vector.load %arg6[%c0_5, %c0_6] : memref<32x128xf32, #tpu.memory_space<vmem>>, vector<32x128xf32>
    tpu.vector_store %arg6[%c0_5, %c0_6], %9 {strides = array<i32>} : memref<32x128xf32, #tpu.memory_space<vmem>>, vector<32x128xf32>,
    %c0_i32_7 = arith.constant 0 : i32
    %11 = arith.cmpi eq, %arg2, %c0_i32_7 : i32
    %12 = arith.extui %11 : i1 to i32
    %c0_i32_8 = arith.constant 0 : i32
    %13 = arith.cmpi ne, %12, %c0_i32_8 : i32
    scf.if %13 {
      %c0_9 = arith.constant 0 : index
      %c0_10 = arith.constant 0 : index
      %14 = vector.load %arg4[%c0_9, %c0_10] : memref<64x32xf32, #tpu.memory_space<vmem>>, vector<64x32xf32>
      %c0_11 = arith.constant 0 : index
      %c0_12 = arith.constant 0 : index
      %15 = vector.load %arg6[%c0_11, %c0_12] : memref<32x128xf32, #tpu.memory_space<vmem>>, vector<32x128xf32>
      %cst = arith.constant dense<0.000000e+00> : vector<64x128xf32>
      %16 = tpu.matmul %14, %15, %cst {dimension_numbers = #tpu.dot_dimension_numbers<[1], [0], [0], [1], [0, 0, 1, 1], [], []>} : vector<64x32xf32>, vector<32x128xf32>, vector<64x128xf32> -> vector<64x128xf32>
      %cst_13 = arith.constant dense<0.000000e+00> : vector<64xf32>
      %17 = vector.multi_reduction <add>, %16, %cst_13 [1] : vector<64x128xf32> to vector<64xf32>
      %18 = vector.shape_cast %17 : vector<64xf32> to vector<64x1xf32>
      %19 = vector.shape_cast %18 : vector<64x1xf32> to vector<1x1x64x1xf32>
      %c0_14 = arith.constant 0 : index
      %c0_15 = arith.constant 0 : index
      %c0_16 = arith.constant 0 : index
      %c0_17 = arith.constant 0 : index
      %20 = vector.load %arg5[%c0_14, %c0_15, %c0_16, %c0_17] : memref<1x1x64x1xf32, #tpu.memory_space<vmem>>, vector<1x1x64x1xf32>
      tpu.vector_store %arg5[%c0_14, %c0_15, %c0_16, %c0_17], %19 {strides = array<i32>} : memref<1x1x64x1xf32, #tpu.memory_space<vmem>>, vector<1x1x64x1xf32>,
    } else {
    }
    return
  }
  func.func @transform_0(%arg0: i32, %arg1: i32, %arg2: i32) -> (i32, i32, i32) {
    %c1_i32 = arith.constant 1 : i32
    %0 = arith.muli %arg1, %c1_i32 : i32
    %1 = arith.addi %0, %arg2 : i32
    %c0_i32 = arith.constant 0 : i32
    %c0_i32_0 = arith.constant 0 : i32
    return %arg0, %c0_i32, %1 : i32, i32, i32
  }
  func.func @transform_1(%arg0: i32, %arg1: i32, %arg2: i32) -> (i32, i32) {
    %c0_i32 = arith.constant 0 : i32
    %c0_i32_0 = arith.constant 0 : i32
    %c0_i32_1 = arith.constant 0 : i32
    return %c0_i32, %c0_i32_0 : i32, i32
  }
  func.func @transform_2(%arg0: i32, %arg1: i32, %arg2: i32) -> (i32, i32, i32, i32) {
    %c0_i32 = arith.constant 0 : i32
    %c0_i32_0 = arith.constant 0 : i32
    %c0_i32_1 = arith.constant 0 : i32
    return %arg0, %arg1, %c0_i32, %c0_i32_0 : i32, i32, i32, i32
  }
}

</mosaic_0001>

<llo_original>
// kernel: context_embedding.1
$region0: #{context_embedding.1}
  #allocation0 [shape = 'u32[]', space=smem, size = 0x4, offset = 0x4, fixed_abs, tag = 'smem constant byte address 0x4 - core index']
  #allocation1 [shape = 'u32[72,128]{1,0:T(1,128)}', space=vmem, size = 0x9000, scoped, tag = 'internal scratch']
  #allocation2 [shape = 'f32[32,128]{1,0:T(8,128)}', space=vmem, size = 0x4000, scoped, tag = 'scratch operand']
  %s0 = inlined_call_operand.vmem [shape: f32[2,32,256], index: 0, kind: input, shape index: {}]
  %s1 = inlined_call_operand.vmem [shape: f32[64,32], index: 1, kind: input, shape index: {}]
  %s2 = inlined_call_operand.vmem [shape: f32[2,1,64,1], index: 2, kind: output, shape index: {}]
  %s3 = sld [smem:[#allocation0]]
  $region49: #{context_embedding.1} parent=0
    _
  %s5 = ssub.s32 1, %s3
  %s6 = scalar_select 0, %s5, %s3
  loop: start=0, step=1, limit=4
  $region2: #{context_embedding.1} parent=0 // loop_pre_header
    _
  $region3: #{context_embedding.1} parent=0 // loop_header
    %s8 = sphi 0, %s12
    %p9 = scmp.ge.s32.totalorder %s8, 4
    %s15 = sphi 0, %s34
    %s16 = sphi 0, %s30
    %s17 = sphi 0, %s26
    %s18 = sphi 0, %s15
    %s19 = sphi 0, %s16
    %s20 = sphi 0, %s17
    %s21 = sphi 0, %s18
    %s22 = sphi 0, %s19
    %s23 = sphi 0, %s20
    %s41 = sphi 0, %s43
    %s44 = sphi 0, %s41
    %s45 = sphi 0, %s44
    %s61 = sphi 0, %s45
    %s65 = sphi 0, %s65
    %s67 = sphi 0, %s65
    %s68 = sphi 0, %s67
    %s82 = sphi 0, %s68
    %s90 = sphi 0, %s92
    %s93 = sphi 0, %s90
    %s94 = sphi 0, %s93
    %s110 = sphi 0, %s94
  $region4: #{context_embedding.1} parent=0 // loop_header_branch
    %11 = sbr.rel (%p9) target = $region8
  $region5: #{context_embedding.1} parent=0 // loop_body
    %s13 = ssub.s32 %s8, 1
    %s14 = ssub.s32 %s8, 2
    %s24 = sadd.s32 1, %s17
    %p25 = scmp.ge.s32.totalorder %s24, 1
    %s26 = scalar_select %p25, 0, %s24
    %s27 = sadd.s32 1, %s16
    %s28 = scalar_select %p25, %s27, %s16
    %p29 = scmp.ge.s32.totalorder %s28, 1
    %s30 = scalar_select %p29, 0, %s28
    %s31 = sadd.s32 1, %s15
    %s32 = scalar_select %p29, %s31, %s15
    %p33 = scmp.ge.s32.totalorder %s32, 2
    %s34 = scalar_select %p33, 0, %s32
    %s35 = sadd.s32 %s16, %s17
    %s36 = sadd.s32 %s30, %s26
    %s37 = ssub.s32 %s15, %s34
    %s38 = ssub.s32 %s35, %s36
    %s39 = sor.u32 %s37, %s38
    %p40 = scmp.eq.s32.totalorder %s39, 0
    %s42 = sadd.s32 %s41, 1
    %s43 = scalar_select %p40, %s41, %s42
    %p46 = pneg %p40
    %p47 = scmp.eq.s32.totalorder %s8, 1
    %p48 = por %p46, %p47
    %p49 = scmp.ne.s32.totalorder %s41, %s44
    %p50 = scmp.eq.s32.totalorder %s8, 0
    %p51 = por %p49, %p50
    %p52 = scmp.ne.s32.totalorder %s41, %s44
    %p53 = scmp.eq.s32.totalorder %s13, 1
    %p54 = por %p52, %p53
    %p55 = scmp.ne.s32.totalorder %s44, %s45
    %p56 = scmp.eq.s32.totalorder %s13, 0
    %p57 = por %p55, %p56
    %p58 = scmp.ne.s32.totalorder %s44, %s45
    %p59 = scmp.eq.s32.totalorder %s14, 1
    %p60 = por %p58, %p59
    %p62 = scmp.ne.s32.totalorder %s45, %s61
    %p63 = scmp.eq.s32.totalorder %s14, 0
    %p64 = por %p62, %p63
    %s66 = sadd.s32 %s65, 1
    %p69 = scmp.eq.s32.totalorder %s8, 1
    %p70 = scmp.ne.s32.totalorder %s65, %s67
    %p71 = scmp.eq.s32.totalorder %s8, 0
    %p72 = por %p70, %p71
    %p73 = scmp.ne.s32.totalorder %s65, %s67
    %p74 = scmp.eq.s32.totalorder %s13, 1
    %p75 = por %p73, %p74
    %p76 = scmp.ne.s32.totalorder %s67, %s68
    %p77 = scmp.eq.s32.totalorder %s13, 0
    %p78 = por %p76, %p77
    %p79 = scmp.ne.s32.totalorder %s67, %s68
    %p80 = scmp.eq.s32.totalorder %s14, 1
    %p81 = por %p79, %p80
    %p83 = scmp.ne.s32.totalorder %s68, %s82
    %p84 = scmp.eq.s32.totalorder %s14, 0
    %p85 = por %p83, %p84
    %s86 = ssub.s32 %s15, %s34
    %s87 = ssub.s32 %s16, %s30
    %s88 = sor.u32 %s86, %s87
    %p89 = scmp.eq.s32.totalorder %s88, 0
    %s91 = sadd.s32 %s90, 1
    %s92 = scalar_select %p89, %s90, %s91
    %p95 = pneg %p89
    %p96 = scmp.eq.s32.totalorder %s8, 1
    %p97 = por %p95, %p96
    %p98 = scmp.ne.s32.totalorder %s90, %s93
    %p99 = scmp.eq.s32.totalorder %s8, 0
    %p100 = por %p98, %p99
    %p101 = scmp.ne.s32.totalorder %s90, %s93
    %p102 = scmp.eq.s32.totalorder %s13, 1
    %p103 = por %p101, %p102
    %p104 = scmp.ne.s32.totalorder %s93, %s94
    %p105 = scmp.eq.s32.totalorder %s13, 0
    %p106 = por %p104, %p105
    %p107 = scmp.ne.s32.totalorder %s93, %s94
    %p108 = scmp.eq.s32.totalorder %s14, 1
    %p109 = por %p107, %p108
    %p111 = scmp.ne.s32.totalorder %s94, %s110
    %p112 = scmp.eq.s32.totalorder %s14, 0
    %p113 = por %p111, %p112
    %p114 = scmp.le.s32.totalorder 1, %s8
    %p115 = scmp.lt.s32.totalorder %s8, 3
    %p116 = pnand %p114, %p115
    %p117 = pneg %p116
    // Predicated region
    $region9: #{context_embedding.1} parent=5 // pred_check
      _
    $region10: #{context_embedding.1} parent=5 // pred_check_branch
      %119 = sbr.rel (%p116) target = $region12
    $region11: #{context_embedding.1} parent=5 // pred_region
      %s120 = ssub.s32 %s8, 1
      // Predicated region
      $region13: #{context_embedding.1} parent=11 // pred_check
        %p121 = pneg %p78
      $region14: #{context_embedding.1} parent=11 // pred_check_branch
        %123 = sbr.rel (%p121) target = $region16
      $region15: #{context_embedding.1} parent=11 // pred_region
        _
      $region16: #{context_embedding.1} parent=11 // pred_fallthru
        _
    $region12: #{context_embedding.1} parent=5 // pred_fallthru
      _
    %p124 = scmp.lt.s32.totalorder %s8, 2
    // Predicated region
    $region17: #{context_embedding.1} parent=5 // pred_check
      %p125 = pneg %p124
    $region18: #{context_embedding.1} parent=5 // pred_check_branch
      %127 = sbr.rel (%p125) target = $region20
    $region19: #{context_embedding.1} parent=5 // pred_region
      // Predicated region
      $region21: #{context_embedding.1} parent=19 // pred_check
        %p128 = pneg %p51
      $region22: #{context_embedding.1} parent=19 // pred_check_branch
        %130 = sbr.rel (%p128) target = $region24
      $region23: #{context_embedding.1} parent=19 // pred_region
        %s131 = sadd.s32 %s16, %s17
        %s132 = smul.u32 2, %s131
        %p133 = scmp.lt.s32.totalorder %s15, 1
        %s134 = scalar_select %p133, %s15, 1
        %p135 = scmp.lt.s32.totalorder %s132, 1
        %s136 = scalar_select %p135, %s132, 1
        %s137 = smul.addr %s134, 8
        %s138 = sadd.s32 %s136, %s137
        %s139 = smul.addr %s138, 8
        %s140 = scalar_lea.vmem %s0, %s139
        %s141 = sadd.s32 %s16, %s17
        %s142 = smul.u32 2, %s141
      $region24: #{context_embedding.1} parent=19 // pred_fallthru
        _
    $region20: #{context_embedding.1} parent=5 // pred_fallthru
      _
    %p143 = scmp.le.s32.totalorder 1, %s8
    %p144 = scmp.lt.s32.totalorder %s8, 3
    %p145 = pnand %p143, %p144
    %p146 = pneg %p145
    // Predicated region
    $region25: #{context_embedding.1} parent=5 // pred_check
      _
    $region26: #{context_embedding.1} parent=5 // pred_check_branch
      %148 = sbr.rel (%p145) target = $region28
    $region27: #{context_embedding.1} parent=5 // pred_region
      %s149 = ssub.s32 %s8, 1
      %s150 = sadd.s32 %s19, %s20
      %s151 = smul.u32 2, %s150
      %p152 = scmp.lt.s32.totalorder %s18, 1
      %s153 = scalar_select %p152, %s18, 1
      %p154 = scmp.lt.s32.totalorder %s151, 1
      %s155 = scalar_select %p154, %s151, 1
      %s156 = smul.addr %s153, 8
      %s157 = sadd.s32 %s155, %s156
      %s158 = smul.addr %s157, 8
      %s159 = scalar_lea.vmem %s0, %s158
      %p160 = pneg %p57
      %p161 = pneg %p54
      %p162 = pneg %p78
      %p163 = pneg %p75
      %p164 = pneg %p106
      %p165 = pneg %p103
      %p166 = scmp.lt.s32.totalorder %s18, 1
      %s167 = scalar_select %p166, %s18, 1
      %p168 = scmp.lt.s32.totalorder %s19, 0
      %s169 = scalar_select %p168, %s19, 0
      %s170 = smul.addr %s169, 8
      %s171 = smul.addr %s167, 8
      %s172 = sadd.s32 %s170, %s171
      %s173 = smul.addr %s172, 8
      %s174 = scalar_lea.vmem %s2, %s173
      %s175 = sadd.s32 %s19, %s20
      %s176 = smul.u32 2, %s175
      %p177 = scmp.lt.s32.totalorder %s18, 1
      %s178 = scalar_select %p177, %s18, 1
      %p179 = scmp.lt.s32.totalorder %s176, 1
      %s180 = scalar_select %p179, %s176, 1
      %s181 = smul.addr %s178, 8
      %s182 = sadd.s32 %s180, %s181
      %s183 = smul.addr %s182, 8
      %s184 = scalar_lea.vmem %s0, %s183
      %s185 = sadd.s32 %s19, %s20
      %s186 = smul.u32 2, %s185
      %p187 = scmp.lt.s32.totalorder %s18, 1
      %s188 = scalar_select %p187, %s18, 1
      %p189 = scmp.lt.s32.totalorder %s19, 0
      %s190 = scalar_select %p189, %s19, 0
      %s191 = smul.addr %s190, 8
      %s192 = smul.addr %s188, 8
      %s193 = sadd.s32 %s191, %s192
      %s194 = smul.addr %s193, 8
      %s195 = scalar_lea.vmem %s2, %s194
      %p196 = scmp.eq.s32.totalorder %s20, 0
      // Predicated region
      $region29: #{context_embedding.1} parent=27 // pred_check
        %p197 = pneg %p196
      $region30: #{context_embedding.1} parent=27 // pred_check_branch
        %199 = sbr.rel (%p197) target = $region32
      $region31: #{context_embedding.1} parent=27 // pred_region
        %200 = vst [vmem:[#allocation2] sm:$0xff] 0.0
        %201 = vst [vmem:[#allocation2 + $0x8] sm:$0xff] 0.0
        %202 = vst [vmem:[#allocation2 + $0x10] sm:$0xff] 0.0
        %203 = vst [vmem:[#allocation2 + $0x18] sm:$0xff] 0.0
      $region32: #{context_embedding.1} parent=27 // pred_fallthru
        _
      %v204 = vld [vmem:[%s184] sm:$0xff]
      %v205 = vld [vmem:[%s184 + $0x8] sm:$0xff]
      %v206 = vld [vmem:[%s184 + $0x10] sm:$0xff]
      %v207 = vld [vmem:[%s184 + $0x18] sm:$0xff]
      %v208 = vld [vmem:[%s184 + $0x20] sm:$0xff]
      %v209 = vld [vmem:[%s184 + $0x28] sm:$0xff]
      %v210 = vld [vmem:[%s184 + $0x30] sm:$0xff]
      %v211 = vld [vmem:[%s184 + $0x38] sm:$0xff]
      %v212 = vld [vmem:[#allocation2] sm:$0xff]
      %v213 = vld [vmem:[#allocation2 + $0x8] sm:$0xff]
      %v214 = vld [vmem:[#allocation2 + $0x10] sm:$0xff]
      %v215 = vld [vmem:[#allocation2 + $0x18] sm:$0xff]
      %v216 = vadd.f32 %v204, %v205
      %v217 = vadd.f32 %v206, %v207
      %v218 = vadd.f32 %v208, %v209
      %v219 = vadd.f32 %v210, %v211
      %v220 = vadd.f32 %v212, %v216
      %v221 = vadd.f32 %v213, %v217
      %v222 = vadd.f32 %v214, %v218
      %v223 = vadd.f32 %v215, %v219
      %224 = vst [vmem:[#allocation2] sm:$0xff] %v220
      %225 = vst [vmem:[#allocation2 + $0x8] sm:$0xff] %v221
      %226 = vst [vmem:[#allocation2 + $0x10] sm:$0xff] %v222
      %227 = vst [vmem:[#allocation2 + $0x18] sm:$0xff] %v223
      // Predicated region
      $region33: #{context_embedding.1} parent=27 // pred_check
        %p228 = pneg %p196
      $region34: #{context_embedding.1} parent=27 // pred_check_branch
        %230 = sbr.rel (%p228) target = $region36
      $region35: #{context_embedding.1} parent=27 // pred_region
        %v231 = vld [vmem:[%s1] sm:$0xff]
        %v232 = vld [vmem:[%s1 + $0x8] sm:$0xff]
        %v233 = vld [vmem:[%s1 + $0x10] sm:$0xff]
        %v234 = vld [vmem:[%s1 + $0x18] sm:$0xff]
        %v235 = vld [vmem:[%s1 + $0x20] sm:$0xff]
        %v236 = vld [vmem:[%s1 + $0x28] sm:$0xff]
        %v237 = vld [vmem:[%s1 + $0x30] sm:$0xff]
        %v238 = vld [vmem:[%s1 + $0x38] sm:$0xff]
        %v239 = vld [vmem:[#allocation2] sm:$0xff]
        %v240 = vld [vmem:[#allocation2 + $0x8] sm:$0xff]
        %v241 = vld [vmem:[#allocation2 + $0x10] sm:$0xff]
        %v242 = vld [vmem:[#allocation2 + $0x18] sm:$0xff]
        %vm243 = vcmask 261120
        %v245 = vsel %vm243, %v231, 0
        %v248 = vsel %vm243, %v232, 0
        %v251 = vsel %vm243, %v233, 0
        %v254 = vsel %vm243, %v234, 0
        %v257 = vsel %vm243, %v235, 0
        %v260 = vsel %vm243, %v236, 0
        %v263 = vsel %vm243, %v237, 0
        %v266 = vsel %vm243, %v238, 0
        %268 = vmatpush.msra.mxu0 0.0
        %269 = vmatpush.msra.mxu0 0.0
        %270 = vmatpush.msra.mxu0 0.0
        %271 = vmatpush.msra.mxu0 0.0
        %272 = vmatpush.msra.mxu0 0.0
        %273 = vmatpush.msra.mxu0 0.0
        %274 = vmatpush.msra.mxu0 0.0
        %275 = vmatpush.msra.mxu0 0.0
        %276 = vmatpush.msra.mxu0 0.0
        %277 = vmatpush.msra.mxu0 0.0
        %278 = vmatpush.msra.mxu0 0.0
        %279 = vmatpush.msra.mxu0 0.0
        %280 = vmatpush.msra.mxu0 %v242
        %281 = vmatpush.msra.mxu0 %v241
        %282 = vmatpush.msra.mxu0 %v240
        %283 = vmatpush.msra.mxu0 %v239
        %284 = vmatmul.f32.gmra.mxu0 %v245
        %v285 = vpop.f32.mrf.mxu0
        %v286 = vadd.f32 0.0, %v285
        %287 = vmatmul.f32.gmra.mxu0 %v248
        %v288 = vpop.f32.mrf.mxu0
        %v289 = vadd.f32 0.0, %v288
        %290 = vmatmul.f32.gmra.mxu0 %v251
        %v291 = vpop.f32.mrf.mxu0
        %v292 = vadd.f32 0.0, %v291
        %293 = vmatmul.f32.gmra.mxu0 %v254
        %v294 = vpop.f32.mrf.mxu0
        %v295 = vadd.f32 0.0, %v294
        %296 = vmatmul.f32.gmra.mxu0 %v257
        %v297 = vpop.f32.mrf.mxu0
        %v298 = vadd.f32 0.0, %v297
        %299 = vmatmul.f32.gmra.mxu0 %v260
        %v300 = vpop.f32.mrf.mxu0
        %v301 = vadd.f32 0.0, %v300
        %302 = vmatmul.f32.gmra.mxu0 %v263
        %v303 = vpop.f32.mrf.mxu0
        %v304 = vadd.f32 0.0, %v303
        %305 = vmatmul.f32.gmra.mxu0 %v266
        %v306 = vpop.f32.mrf.mxu0
        %v307 = vadd.f32 0.0, %v306
        %308 = vdwg.mxu0
        %309 = vadd.xlane.f32.xlu0 %v286
        %v310 = vpop.xlane.xlu0 %309
        %311 = vadd.xlane.f32.xlu0 %v289
        %v312 = vpop.xlane.xlu0 %311
        %313 = vadd.xlane.f32.xlu0 %v292
        %v314 = vpop.xlane.xlu0 %313
        %315 = vadd.xlane.f32.xlu0 %v295
        %v316 = vpop.xlane.xlu0 %315
        %317 = vadd.xlane.f32.xlu0 %v298
        %v318 = vpop.xlane.xlu0 %317
        %319 = vadd.xlane.f32.xlu0 %v301
        %v320 = vpop.xlane.xlu0 %319
        %321 = vadd.xlane.f32.xlu0 %v304
        %v322 = vpop.xlane.xlu0 %321
        %323 = vadd.xlane.f32.xlu0 %v307
        %v324 = vpop.xlane.xlu0 %323
        %vm325 = vcmask 7168
        %326 = vst.msk [vmem:[%s195] sm:$0xff] %vm325, %v310
        %327 = vst.msk [vmem:[%s195 + $0x8] sm:$0xff] %vm325, %v312
        %328 = vst.msk [vmem:[%s195 + $0x10] sm:$0xff] %vm325, %v314
        %329 = vst.msk [vmem:[%s195 + $0x18] sm:$0xff] %vm325, %v316
        %330 = vst.msk [vmem:[%s195 + $0x20] sm:$0xff] %vm325, %v318
        %331 = vst.msk [vmem:[%s195 + $0x28] sm:$0xff] %vm325, %v320
        %332 = vst.msk [vmem:[%s195 + $0x30] sm:$0xff] %vm325, %v322
        %333 = vst.msk [vmem:[%s195 + $0x38] sm:$0xff] %vm325, %v324
      $region36: #{context_embedding.1} parent=27 // pred_fallthru
        _
      %p334 = scmp.lt.s32.totalorder %s18, 1
      %s335 = scalar_select %p334, %s18, 1
      %p336 = scmp.lt.s32.totalorder %s19, 0
      %s337 = scalar_select %p336, %s19, 0
      %s338 = smul.addr %s337, 8
      %s339 = smul.addr %s335, 8
      %s340 = sadd.s32 %s338, %s339
      %s341 = smul.addr %s340, 8
      %s342 = scalar_lea.vmem %s2, %s341
      // Predicated region
      $region37: #{context_embedding.1} parent=27 // pred_check
        %p343 = pneg %p103
      $region38: #{context_embedding.1} parent=27 // pred_check_branch
        %345 = sbr.rel (%p343) target = $region40
      $region39: #{context_embedding.1} parent=27 // pred_region
        _
      $region40: #{context_embedding.1} parent=27 // pred_fallthru
        _
    $region28: #{context_embedding.1} parent=5 // pred_fallthru
      _
    %p346 = scmp.le.s32.totalorder 2, %s8
    // Predicated region
    $region41: #{context_embedding.1} parent=5 // pred_check
      %p347 = pneg %p346
    $region42: #{context_embedding.1} parent=5 // pred_check_branch
      %349 = sbr.rel (%p347) target = $region44
    $region43: #{context_embedding.1} parent=5 // pred_region
      %s350 = ssub.s32 %s8, 2
      // Predicated region
      $region45: #{context_embedding.1} parent=43 // pred_check
        %p351 = pneg %p109
      $region46: #{context_embedding.1} parent=43 // pred_check_branch
        %353 = sbr.rel (%p351) target = $region48
      $region47: #{context_embedding.1} parent=43 // pred_region
        %p354 = scmp.lt.s32.totalorder %s21, 1
        %s355 = scalar_select %p354, %s21, 1
        %p356 = scmp.lt.s32.totalorder %s22, 0
        %s357 = scalar_select %p356, %s22, 0
        %s358 = smul.addr %s357, 8
        %s359 = smul.addr %s355, 8
        %s360 = sadd.s32 %s358, %s359
        %s361 = smul.addr %s360, 8
        %s362 = scalar_lea.vmem %s2, %s361
      $region48: #{context_embedding.1} parent=43 // pred_fallthru
        _
    $region44: #{context_embedding.1} parent=5 // pred_fallthru
      _
  $region6: #{context_embedding.1} parent=0 // loop_footer
    %s12 = sadd.s32 1, %s8
  $region7: #{context_embedding.1} parent=0 // loop_footer_branch
    %7 = sbr.rel target = $region3
  $region8: #{context_embedding.1} parent=0 // loop_exit
    _

</llo_original>
